<compile_context>
chip_gen: v7x
topology: tpu7x:2x2x1
jax: 0.10.0
libtpu: 0.0.40
codegen_flags: <defaults>
</compile_context>

<pallas_src>
import jax
import jax.numpy as jnp
from jax.experimental import pallas as pl
from jax.experimental.pallas import tpu as pltpu


def _round_up(n, m):
    return ((n + m - 1) // m) * m


# ---------------------------------------------------------------------------
# Pallas kernel: fused MLP forward over one TM-row tile
# ---------------------------------------------------------------------------
def _make_mlp_kernel(n_layers):
    def kernel(*refs):
        x_ref = refs[0]
        o_ref = refs[-1]
        wb = refs[1:-1]  # (w0, b0, w1, b1, ...)

        h = x_ref[...]  # f32 activation tile
        for l in range(n_layers):  # unrolled at trace time
            w = wb[2 * l][...]
            b = wb[2 * l + 1][...]
            # Cast the activation to the weight dtype (f32 or bf16) for the
            # MXU; accumulate in f32; bias-add / ReLU stay f32 elementwise
            # (v5e has no bf16 VALU, and f32 is exact for the reference).
            h = jnp.dot(h.astype(w.dtype), w, preferred_element_type=jnp.float32)
            h = h + b.astype(jnp.float32)
            if l != n_layers - 1:
                h = jnp.maximum(h, 0.0)  # ReLU
        o_ref[...] = h.astype(o_ref.dtype)

    return kernel


# ---------------------------------------------------------------------------
# JAX glue
# ---------------------------------------------------------------------------
def _choose_row_tile(batch, tm_cap=1024):
    """Adaptive row tile: big enough to amortize per-step overhead, small
    enough to split into >= 2 grid steps (v7x megacore) for batch >= 16, and
    never padding a tiny batch up to hundreds of rows."""
    batch_al = _round_up(batch, 8)          # sublane alignment
    tm = _round_up(pl.cdiv(batch_al, 2), 8)  # prefer 2+ tiles when possible
    tm = max(8, min(tm, tm_cap))
    num_tiles = pl.cdiv(batch_al, tm)
    return tm, num_tiles


def mlp_forward(x, params, *, tm_cap=1024):
    """x: (batch, in_dim) f32.  params: list of (W (in,out), b (1,out)).
    Weights may be f32 or bf16 (bf16 -> bf16 MXU inputs, f32 accumulate).
    Returns (batch, out_dim) f32."""
    batch, in_dim = x.shape
    n_layers = len(params)
    out_dim = params[-1][0].shape[1]

    tm, num_tiles = _choose_row_tile(batch, tm_cap)
    batch_pad = num_tiles * tm

    # Only pad when the batch is ragged w.r.t. the tile (zeros; rows are
    # independent so pad rows never contaminate valid outputs).
    if batch_pad != batch:
        x = jnp.pad(x, ((0, batch_pad - batch), (0, 0)))

    flat_args = [x]
    # x: TM-row tiles marching down the batch.
    in_specs = [pl.BlockSpec((tm, in_dim), lambda i: (i, 0))]
    # weights / biases: full-array blocks, constant index_map -> single DMA,
    # resident in VMEM across all grid steps.
    for w, b in params:
        flat_args += [w, b]
        in_specs += [
            pl.BlockSpec(w.shape, lambda i: (0, 0)),
            pl.BlockSpec(b.shape, lambda i: (0, 0)),
        ]

    # Advisory cost estimate from *logical* dims.
    flops = 2 * batch * sum(w.shape[0] * w.shape[1] for w, _ in params)
    bytes_accessed = int(
        batch * in_dim * x.dtype.itemsize
        + sum(w.size * w.dtype.itemsize + b.size * b.dtype.itemsize for w, b in params)
        + batch * out_dim * 4
    )

    out = pl.pallas_call(
        _make_mlp_kernel(n_layers),
        # Logical-width output: no 128-lane padding, no 16x write amplification.
        out_shape=jax.ShapeDtypeStruct((batch_pad, out_dim), jnp.float32),
        grid=(num_tiles,),
        in_specs=in_specs,
        out_specs=pl.BlockSpec((tm, out_dim), lambda i: (i, 0)),
        compiler_params=pltpu.CompilerParams(
            # batch axis is embarrassingly parallel -> lets v7x use both TCs.
            dimension_semantics=("parallel",),
            # Well under every generation's VMEM (tiles + weights << 2 MiB).
            vmem_limit_bytes=32 * 1024 * 1024,
        ),
        cost_estimate=pl.CostEstimate(
            flops=flops, transcendentals=0, bytes_accessed=bytes_accessed
        ),
    )(*flat_args)

    if batch_pad != batch:
        out = out[:batch]
    return out


def cast_weights(params, dtype):
    """Cast weights to `dtype` (e.g. bf16 for v6e/v7x MXU); biases stay f32."""
    return [(w.astype(dtype), b) for w, b in params]


# ---------------------------------------------------------------------------
# Deterministic parameter init (mirrors weight_init: orthogonal W, zero bias)
# ---------------------------------------------------------------------------
def orthogonal_init(key, out_dim, in_dim):
    """Orthogonal init like nn.init.orthogonal_ for weight of shape (out, in)."""
    rows, cols = out_dim, in_dim
    flat = jax.random.normal(key, (rows, cols), dtype=jnp.float32)
    if rows < cols:
        flat = flat.T
    q, r = jnp.linalg.qr(flat)
    d = jnp.sign(jnp.diag(r))
    d = jnp.where(d == 0, 1.0, d)  # guard against an exactly-zero diagonal
    q = q * d[None, :]
    if rows < cols:
        q = q.T
    return q  # (out, in), PyTorch layout


def make_mlp_params(key, input_dim, hidden_dim, output_dim, hidden_depth):
    if hidden_depth == 0:
        dims = [(input_dim, output_dim)]
    else:
        dims = [(input_dim, hidden_dim)]
        dims += [(hidden_dim, hidden_dim)] * (hidden_depth - 1)
        dims += [(hidden_dim, output_dim)]

    params = []
    for d_in, d_out in dims:
        key, sub = jax.random.split(key)
        w = orthogonal_init(sub, d_out, d_in)          # (out, in)
        w_t = jnp.asarray(w.T, dtype=jnp.float32)      # (in, out) for the kernel
        b = jnp.zeros((1, d_out), dtype=jnp.float32)   # bias filled with 0.0
        params.append((w_t, b))
    return params


# pure-JAX reference for correctness
def mlp_ref(x, params):
    h = x
    for i, (w_t, b) in enumerate(params):
        h = h.astype(jnp.float32) @ w_t.astype(jnp.float32) + b
        if i != len(params) - 1:
            h = jnp.maximum(h, 0.0)
    return h


if __name__ == "__main__":
    # MLP(input_dim=16, hidden_dim=32, output_dim=8, hidden_depth=2)
    input_dim, hidden_dim, output_dim, hidden_depth = 16, 32, 8, 2

    key = jax.random.PRNGKey(0)
    key_x1, key_x2, key_p = jax.random.split(key, 3)

    params = make_mlp_params(key_p, input_dim, hidden_dim, output_dim, hidden_depth)

    # Batched path: 512 rows -> two 256-row tiles (splits across both TCs on v7x).
    x_big = jax.random.normal(key_x1, (512, input_dim), dtype=jnp.float32)
    out_big = jax.block_until_ready(mlp_forward(x_big, params))
    ref_big = mlp_ref(x_big, params)
    assert out_big.shape == (512, output_dim)
    assert jnp.allclose(out_big, ref_big, atol=1e-5, rtol=1e-5), "mismatch (batched f32)"

    # Small batch: a single 8-row tile, no 256-row padding, no column padding.
    x_small = jax.random.normal(key_x2, (8, input_dim), dtype=jnp.float32)
    out_small = jax.block_until_ready(mlp_forward(x_small, params))
    ref_small = mlp_ref(x_small, params)
    assert out_small.shape == (8, output_dim)
    assert jnp.allclose(out_small, ref_small, atol=1e-5, rtol=1e-5), "mismatch (small f32)"

    # bf16 MXU-input path (v6e/v7x): bf16 weights + in-kernel bf16 activation
    # cast, f32 accumulate/bias/ReLU.  Looser tolerance per review note.
    params_bf16 = cast_weights(params, jnp.bfloat16)
    out_bf16 = jax.block_until_ready(mlp_forward(x_big, params_bf16))
    assert out_bf16.shape == (512, output_dim)
    assert jnp.allclose(out_bf16, ref_big, atol=5e-2, rtol=5e-2), "mismatch (bf16)"

    print("KERNEL_OK")
</pallas_src>

<mosaic_0001>
module attributes {stable_mosaic.version = 11 : i64} {
  func.func @kernel(%arg0: i32, %arg1: memref<256x16xf32, #tpu.memory_space<vmem>>, %arg2: memref<16x32xf32, #tpu.memory_space<vmem>>, %arg3: memref<1x32xf32, #tpu.memory_space<vmem>>, %arg4: memref<32x32xf32, #tpu.memory_space<vmem>>, %arg5: memref<1x32xf32, #tpu.memory_space<vmem>>, %arg6: memref<32x8xf32, #tpu.memory_space<vmem>>, %arg7: memref<1x8xf32, #tpu.memory_space<vmem>>, %arg8: memref<256x8xf32, #tpu.memory_space<vmem>>) attributes {dimension_semantics = [#tpu.dimension_semantics<parallel>], iteration_bounds = array<i64: 2>, scalar_prefetch = 0 : i64, scratch_operands = 0 : i64, tpu.core_type = #tpu.core_type<tc>, window_params = [{transform_indices = @transform_0, window_bounds = array<i64: 256, 16>}, {pipeline_mode = #tpu.pipeline_mode<synchronous>, transform_indices = @transform_1, window_bounds = array<i64: 16, 32>}, {pipeline_mode = #tpu.pipeline_mode<synchronous>, transform_indices = @transform_2, window_bounds = array<i64: 1, 32>}, {pipeline_mode = #tpu.pipeline_mode<synchronous>, transform_indices = @transform_3, window_bounds = array<i64: 32, 32>}, {pipeline_mode = #tpu.pipeline_mode<synchronous>, transform_indices = @transform_4, window_bounds = array<i64: 1, 32>}, {pipeline_mode = #tpu.pipeline_mode<synchronous>, transform_indices = @transform_5, window_bounds = array<i64: 32, 8>}, {pipeline_mode = #tpu.pipeline_mode<synchronous>, transform_indices = @transform_6, window_bounds = array<i64: 1, 8>}, {transform_indices = @transform_7, window_bounds = array<i64: 256, 8>}]} {
    %c0 = arith.constant 0 : index
    %c0_0 = arith.constant 0 : index
    %0 = vector.load %arg1[%c0, %c0_0] : memref<256x16xf32, #tpu.memory_space<vmem>>, vector<256x16xf32>
    %c0_1 = arith.constant 0 : index
    %c0_2 = arith.constant 0 : index
    %1 = vector.load %arg2[%c0_1, %c0_2] : memref<16x32xf32, #tpu.memory_space<vmem>>, vector<16x32xf32>
    %c0_3 = arith.constant 0 : index
    %c0_4 = arith.constant 0 : index
    %2 = vector.load %arg3[%c0_3, %c0_4] : memref<1x32xf32, #tpu.memory_space<vmem>>, vector<1x32xf32>
    %cst = arith.constant dense<0.000000e+00> : vector<256x32xf32>
    %3 = tpu.matmul %0, %1, %cst {dimension_numbers = #tpu.dot_dimension_numbers<[1], [0], [0], [1], [0, 0, 1, 1], [], []>} : vector<256x16xf32>, vector<16x32xf32>, vector<256x32xf32> -> vector<256x32xf32>
    %4 = vector.broadcast %2 : vector<1x32xf32> to vector<256x32xf32>
    %5 = arith.addf %3, %4 : vector<256x32xf32>
    %cst_5 = arith.constant 0.000000e+00 : f32
    %6 = vector.broadcast %cst_5 : f32 to vector<256x32xf32>
    %7 = arith.maximumf %5, %6 : vector<256x32xf32>
    %c0_6 = arith.constant 0 : index
    %c0_7 = arith.constant 0 : index
    %8 = vector.load %arg4[%c0_6, %c0_7] : memref<32x32xf32, #tpu.memory_space<vmem>>, vector<32x32xf32>
    %c0_8 = arith.constant 0 : index
    %c0_9 = arith.constant 0 : index
    %9 = vector.load %arg5[%c0_8, %c0_9] : memref<1x32xf32, #tpu.memory_space<vmem>>, vector<1x32xf32>
    %cst_10 = arith.constant dense<0.000000e+00> : vector<256x32xf32>
    %10 = tpu.matmul %7, %8, %cst_10 {dimension_numbers = #tpu.dot_dimension_numbers<[1], [0], [0], [1], [0, 0, 1, 1], [], []>} : vector<256x32xf32>, vector<32x32xf32>, vector<256x32xf32> -> vector<256x32xf32>
    %11 = vector.broadcast %9 : vector<1x32xf32> to vector<256x32xf32>
    %12 = arith.addf %10, %11 : vector<256x32xf32>
    %cst_11 = arith.constant 0.000000e+00 : f32
    %13 = vector.broadcast %cst_11 : f32 to vector<256x32xf32>
    %14 = arith.maximumf %12, %13 : vector<256x32xf32>
    %c0_12 = arith.constant 0 : index
    %c0_13 = arith.constant 0 : index
    %15 = vector.load %arg6[%c0_12, %c0_13] : memref<32x8xf32, #tpu.memory_space<vmem>>, vector<32x8xf32>
    %c0_14 = arith.constant 0 : index
    %c0_15 = arith.constant 0 : index
    %16 = vector.load %arg7[%c0_14, %c0_15] : memref<1x8xf32, #tpu.memory_space<vmem>>, vector<1x8xf32>
    %cst_16 = arith.constant dense<0.000000e+00> : vector<256x8xf32>
    %17 = tpu.matmul %14, %15, %cst_16 {dimension_numbers = #tpu.dot_dimension_numbers<[1], [0], [0], [1], [0, 0, 1, 1], [], []>} : vector<256x32xf32>, vector<32x8xf32>, vector<256x8xf32> -> vector<256x8xf32>
    %18 = vector.broadcast %16 : vector<1x8xf32> to vector<256x8xf32>
    %19 = arith.addf %17, %18 : vector<256x8xf32>
    %c0_17 = arith.constant 0 : index
    %c0_18 = arith.constant 0 : index
    %20 = vector.load %arg8[%c0_17, %c0_18] : memref<256x8xf32, #tpu.memory_space<vmem>>, vector<256x8xf32>
    tpu.vector_store %arg8[%c0_17, %c0_18], %19 {strides = array<i32>} : memref<256x8xf32, #tpu.memory_space<vmem>>, vector<256x8xf32>,
    return
  }
  func.func @transform_0(%arg0: i32) -> (i32, i32) {
    %c0_i32 = arith.constant 0 : i32
    %c0_i32_0 = arith.constant 0 : i32
    return %arg0, %c0_i32 : i32, i32
  }
  func.func @transform_1(%arg0: i32) -> (i32, i32) {
    %c0_i32 = arith.constant 0 : i32
    %c0_i32_0 = arith.constant 0 : i32
    %c0_i32_1 = arith.constant 0 : i32
    return %c0_i32, %c0_i32_0 : i32, i32
  }
  func.func @transform_2(%arg0: i32) -> (i32, i32) {
    %c0_i32 = arith.constant 0 : i32
    %c0_i32_0 = arith.constant 0 : i32
    %c0_i32_1 = arith.constant 0 : i32
    return %c0_i32, %c0_i32_0 : i32, i32
  }
  func.func @transform_3(%arg0: i32) -> (i32, i32) {
    %c0_i32 = arith.constant 0 : i32
    %c0_i32_0 = arith.constant 0 : i32
    %c0_i32_1 = arith.constant 0 : i32
    return %c0_i32, %c0_i32_0 : i32, i32
  }
  func.func @transform_4(%arg0: i32) -> (i32, i32) {
    %c0_i32 = arith.constant 0 : i32
    %c0_i32_0 = arith.constant 0 : i32
    %c0_i32_1 = arith.constant 0 : i32
    return %c0_i32, %c0_i32_0 : i32, i32
  }
  func.func @transform_5(%arg0: i32) -> (i32, i32) {
    %c0_i32 = arith.constant 0 : i32
    %c0_i32_0 = arith.constant 0 : i32
    %c0_i32_1 = arith.constant 0 : i32
    return %c0_i32, %c0_i32_0 : i32, i32
  }
  func.func @transform_6(%arg0: i32) -> (i32, i32) {
    %c0_i32 = arith.constant 0 : i32
    %c0_i32_0 = arith.constant 0 : i32
    %c0_i32_1 = arith.constant 0 : i32
    return %c0_i32, %c0_i32_0 : i32, i32
  }
  func.func @transform_7(%arg0: i32) -> (i32, i32) {
    %c0_i32 = arith.constant 0 : i32
    %c0_i32_0 = arith.constant 0 : i32
    return %arg0, %c0_i32 : i32, i32
  }
}

</mosaic_0001>

<llo_original>
// kernel: tpu_custom_call.1
$region0: #{tpu_custom_call.1}
  #allocation0 [shape = 'u32[]', space=smem, size = 0x4, offset = 0x4, fixed_abs, tag = 'smem constant byte address 0x4 - core index']
  #allocation1 [shape = 'u32[144,128]{1,0:T(1,128)}', space=vmem, size = 0x12000, scoped, tag = 'internal scratch']
  %s0 = inlined_call_operand.vmem [shape: f32[512,16], index: 0, kind: input, shape index: {}]
  %s1 = inlined_call_operand.vmem [shape: f32[16,32], index: 1, kind: input, shape index: {}]
  %s2 = inlined_call_operand.vmem [shape: f32[1,32], index: 2, kind: input, shape index: {}]
  %s3 = inlined_call_operand.vmem [shape: f32[32,32], index: 3, kind: input, shape index: {}]
  %s4 = inlined_call_operand.vmem [shape: f32[1,32], index: 4, kind: input, shape index: {}]
  %s5 = inlined_call_operand.vmem [shape: f32[32,8], index: 5, kind: input, shape index: {}]
  %s6 = inlined_call_operand.vmem [shape: f32[1,8], index: 6, kind: input, shape index: {}]
  %s7 = inlined_call_operand.vmem [shape: f32[512,8], index: 7, kind: output, shape index: {}]
  %s8 = sld [smem:[#allocation0]]
  $region61: #{tpu_custom_call.1} parent=0
    _
  %s10 = ssub.s32 1, %s8
  %s11 = scalar_select 0, %s10, %s8
  loop: start=0, step=1, limit=4
  $region2: #{tpu_custom_call.1} parent=0 // loop_pre_header
    _
  $region3: #{tpu_custom_call.1} parent=0 // loop_header
    %s13 = sphi 0, %s17
    %p14 = scmp.ge.s32.totalorder %s13, 4
    %s23 = sphi 0, %s25
    %s26 = sphi 0, %s23
    %s27 = sphi 0, %s26
    %s43 = sphi 0, %s27
    %s47 = sphi 0, %s47
    %s49 = sphi 0, %s47
    %s50 = sphi 0, %s49
    %s64 = sphi 0, %s50
    %s68 = sphi 0, %s68
    %s70 = sphi 0, %s68
    %s71 = sphi 0, %s70
    %s85 = sphi 0, %s71
    %s89 = sphi 0, %s89
    %s91 = sphi 0, %s89
    %s92 = sphi 0, %s91
    %s106 = sphi 0, %s92
    %s110 = sphi 0, %s110
    %s112 = sphi 0, %s110
    %s113 = sphi 0, %s112
    %s127 = sphi 0, %s113
    %s131 = sphi 0, %s131
    %s133 = sphi 0, %s131
    %s134 = sphi 0, %s133
    %s148 = sphi 0, %s134
    %s152 = sphi 0, %s152
    %s154 = sphi 0, %s152
    %s155 = sphi 0, %s154
    %s169 = sphi 0, %s155
    %s175 = sphi 0, %s177
    %s178 = sphi 0, %s175
    %s179 = sphi 0, %s178
    %s195 = sphi 0, %s179
  $region4: #{tpu_custom_call.1} parent=0 // loop_header_branch
    %16 = sbr.rel (%p14) target = $region8
  $region5: #{tpu_custom_call.1} parent=0 // loop_body
    %s18 = ssub.s32 %s13, 1
    %s19 = ssub.s32 %s13, 2
    %s20 = sadd.s32 %s13, 1
    %s21 = ssub.s32 %s13, %s20
    %p22 = scmp.eq.s32.totalorder %s21, 0
    %s24 = sadd.s32 %s23, 1
    %s25 = scalar_select %p22, %s23, %s24
    %p28 = pneg %p22
    %p29 = scmp.eq.s32.totalorder %s13, 1
    %p30 = por %p28, %p29
    %p31 = scmp.ne.s32.totalorder %s23, %s26
    %p32 = scmp.eq.s32.totalorder %s13, 0
    %p33 = por %p31, %p32
    %p34 = scmp.ne.s32.totalorder %s23, %s26
    %p35 = scmp.eq.s32.totalorder %s18, 1
    %p36 = por %p34, %p35
    %p37 = scmp.ne.s32.totalorder %s26, %s27
    %p38 = scmp.eq.s32.totalorder %s18, 0
    %p39 = por %p37, %p38
    %p40 = scmp.ne.s32.totalorder %s26, %s27
    %p41 = scmp.eq.s32.totalorder %s19, 1
    %p42 = por %p40, %p41
    %p44 = scmp.ne.s32.totalorder %s27, %s43
    %p45 = scmp.eq.s32.totalorder %s19, 0
    %p46 = por %p44, %p45
    %s48 = sadd.s32 %s47, 1
    %p51 = scmp.eq.s32.totalorder %s13, 1
    %p52 = scmp.ne.s32.totalorder %s47, %s49
    %p53 = scmp.eq.s32.totalorder %s13, 0
    %p54 = por %p52, %p53
    %p55 = scmp.ne.s32.totalorder %s47, %s49
    %p56 = scmp.eq.s32.totalorder %s18, 1
    %p57 = por %p55, %p56
    %p58 = scmp.ne.s32.totalorder %s49, %s50
    %p59 = scmp.eq.s32.totalorder %s18, 0
    %p60 = por %p58, %p59
    %p61 = scmp.ne.s32.totalorder %s49, %s50
    %p62 = scmp.eq.s32.totalorder %s19, 1
    %p63 = por %p61, %p62
    %p65 = scmp.ne.s32.totalorder %s50, %s64
    %p66 = scmp.eq.s32.totalorder %s19, 0
    %p67 = por %p65, %p66
    %s69 = sadd.s32 %s68, 1
    %p72 = scmp.eq.s32.totalorder %s13, 1
    %p73 = scmp.ne.s32.totalorder %s68, %s70
    %p74 = scmp.eq.s32.totalorder %s13, 0
    %p75 = por %p73, %p74
    %p76 = scmp.ne.s32.totalorder %s68, %s70
    %p77 = scmp.eq.s32.totalorder %s18, 1
    %p78 = por %p76, %p77
    %p79 = scmp.ne.s32.totalorder %s70, %s71
    %p80 = scmp.eq.s32.totalorder %s18, 0
    %p81 = por %p79, %p80
    %p82 = scmp.ne.s32.totalorder %s70, %s71
    %p83 = scmp.eq.s32.totalorder %s19, 1
    %p84 = por %p82, %p83
    %p86 = scmp.ne.s32.totalorder %s71, %s85
    %p87 = scmp.eq.s32.totalorder %s19, 0
    %p88 = por %p86, %p87
    %s90 = sadd.s32 %s89, 1
    %p93 = scmp.eq.s32.totalorder %s13, 1
    %p94 = scmp.ne.s32.totalorder %s89, %s91
    %p95 = scmp.eq.s32.totalorder %s13, 0
    %p96 = por %p94, %p95
    %p97 = scmp.ne.s32.totalorder %s89, %s91
    %p98 = scmp.eq.s32.totalorder %s18, 1
    %p99 = por %p97, %p98
    %p100 = scmp.ne.s32.totalorder %s91, %s92
    %p101 = scmp.eq.s32.totalorder %s18, 0
    %p102 = por %p100, %p101
    %p103 = scmp.ne.s32.totalorder %s91, %s92
    %p104 = scmp.eq.s32.totalorder %s19, 1
    %p105 = por %p103, %p104
    %p107 = scmp.ne.s32.totalorder %s92, %s106
    %p108 = scmp.eq.s32.totalorder %s19, 0
    %p109 = por %p107, %p108
    %s111 = sadd.s32 %s110, 1
    %p114 = scmp.eq.s32.totalorder %s13, 1
    %p115 = scmp.ne.s32.totalorder %s110, %s112
    %p116 = scmp.eq.s32.totalorder %s13, 0
    %p117 = por %p115, %p116
    %p118 = scmp.ne.s32.totalorder %s110, %s112
    %p119 = scmp.eq.s32.totalorder %s18, 1
    %p120 = por %p118, %p119
    %p121 = scmp.ne.s32.totalorder %s112, %s113
    %p122 = scmp.eq.s32.totalorder %s18, 0
    %p123 = por %p121, %p122
    %p124 = scmp.ne.s32.totalorder %s112, %s113
    %p125 = scmp.eq.s32.totalorder %s19, 1
    %p126 = por %p124, %p125
    %p128 = scmp.ne.s32.totalorder %s113, %s127
    %p129 = scmp.eq.s32.totalorder %s19, 0
    %p130 = por %p128, %p129
    %s132 = sadd.s32 %s131, 1
    %p135 = scmp.eq.s32.totalorder %s13, 1
    %p136 = scmp.ne.s32.totalorder %s131, %s133
    %p137 = scmp.eq.s32.totalorder %s13, 0
    %p138 = por %p136, %p137
    %p139 = scmp.ne.s32.totalorder %s131, %s133
    %p140 = scmp.eq.s32.totalorder %s18, 1
    %p141 = por %p139, %p140
    %p142 = scmp.ne.s32.totalorder %s133, %s134
    %p143 = scmp.eq.s32.totalorder %s18, 0
    %p144 = por %p142, %p143
    %p145 = scmp.ne.s32.totalorder %s133, %s134
    %p146 = scmp.eq.s32.totalorder %s19, 1
    %p147 = por %p145, %p146
    %p149 = scmp.ne.s32.totalorder %s134, %s148
    %p150 = scmp.eq.s32.totalorder %s19, 0
    %p151 = por %p149, %p150
    %s153 = sadd.s32 %s152, 1
    %p156 = scmp.eq.s32.totalorder %s13, 1
    %p157 = scmp.ne.s32.totalorder %s152, %s154
    %p158 = scmp.eq.s32.totalorder %s13, 0
    %p159 = por %p157, %p158
    %p160 = scmp.ne.s32.totalorder %s152, %s154
    %p161 = scmp.eq.s32.totalorder %s18, 1
    %p162 = por %p160, %p161
    %p163 = scmp.ne.s32.totalorder %s154, %s155
    %p164 = scmp.eq.s32.totalorder %s18, 0
    %p165 = por %p163, %p164
    %p166 = scmp.ne.s32.totalorder %s154, %s155
    %p167 = scmp.eq.s32.totalorder %s19, 1
    %p168 = por %p166, %p167
    %p170 = scmp.ne.s32.totalorder %s155, %s169
    %p171 = scmp.eq.s32.totalorder %s19, 0
    %p172 = por %p170, %p171
    %s173 = ssub.s32 %s13, %s20
    %p174 = scmp.eq.s32.totalorder %s173, 0
    %s176 = sadd.s32 %s175, 1
    %s177 = scalar_select %p174, %s175, %s176
    %p180 = pneg %p174
    %p181 = scmp.eq.s32.totalorder %s13, 1
    %p182 = por %p180, %p181
    %p183 = scmp.ne.s32.totalorder %s175, %s178
    %p184 = scmp.eq.s32.totalorder %s13, 0
    %p185 = por %p183, %p184
    %p186 = scmp.ne.s32.totalorder %s175, %s178
    %p187 = scmp.eq.s32.totalorder %s18, 1
    %p188 = por %p186, %p187
    %p189 = scmp.ne.s32.totalorder %s178, %s179
    %p190 = scmp.eq.s32.totalorder %s18, 0
    %p191 = por %p189, %p190
    %p192 = scmp.ne.s32.totalorder %s178, %s179
    %p193 = scmp.eq.s32.totalorder %s19, 1
    %p194 = por %p192, %p193
    %p196 = scmp.ne.s32.totalorder %s179, %s195
    %p197 = scmp.eq.s32.totalorder %s19, 0
    %p198 = por %p196, %p197
    %p199 = scmp.le.s32.totalorder 1, %s13
    %p200 = scmp.lt.s32.totalorder %s13, 3
    %p201 = pnand %p199, %p200
    %p202 = pneg %p201
    // Predicated region
    $region9: #{tpu_custom_call.1} parent=5 // pred_check
      _
    $region10: #{tpu_custom_call.1} parent=5 // pred_check_branch
      %204 = sbr.rel (%p201) target = $region12
    $region11: #{tpu_custom_call.1} parent=5 // pred_region
      %s205 = ssub.s32 %s13, 1
      // Predicated region
      $region13: #{tpu_custom_call.1} parent=11 // pred_check
        %p206 = pneg %p60
      $region14: #{tpu_custom_call.1} parent=11 // pred_check_branch
        %208 = sbr.rel (%p206) target = $region16
      $region15: #{tpu_custom_call.1} parent=11 // pred_region
        _
      $region16: #{tpu_custom_call.1} parent=11 // pred_fallthru
        _
      // Predicated region
      $region17: #{tpu_custom_call.1} parent=11 // pred_check
        %p209 = pneg %p81
      $region18: #{tpu_custom_call.1} parent=11 // pred_check_branch
        %211 = sbr.rel (%p209) target = $region20
      $region19: #{tpu_custom_call.1} parent=11 // pred_region
        _
      $region20: #{tpu_custom_call.1} parent=11 // pred_fallthru
        _
      // Predicated region
      $region21: #{tpu_custom_call.1} parent=11 // pred_check
        %p212 = pneg %p102
      $region22: #{tpu_custom_call.1} parent=11 // pred_check_branch
        %214 = sbr.rel (%p212) target = $region24
      $region23: #{tpu_custom_call.1} parent=11 // pred_region
        _
      $region24: #{tpu_custom_call.1} parent=11 // pred_fallthru
        _
      // Predicated region
      $region25: #{tpu_custom_call.1} parent=11 // pred_check
        %p215 = pneg %p123
      $region26: #{tpu_custom_call.1} parent=11 // pred_check_branch
        %217 = sbr.rel (%p215) target = $region28
      $region27: #{tpu_custom_call.1} parent=11 // pred_region
        _
      $region28: #{tpu_custom_call.1} parent=11 // pred_fallthru
        _
      // Predicated region
      $region29: #{tpu_custom_call.1} parent=11 // pred_check
        %p218 = pneg %p144
      $region30: #{tpu_custom_call.1} parent=11 // pred_check_branch
        %220 = sbr.rel (%p218) target = $region32
      $region31: #{tpu_custom_call.1} parent=11 // pred_region
        _
      $region32: #{tpu_custom_call.1} parent=11 // pred_fallthru
        _
      // Predicated region
      $region33: #{tpu_custom_call.1} parent=11 // pred_check
        %p221 = pneg %p165
      $region34: #{tpu_custom_call.1} parent=11 // pred_check_branch
        %223 = sbr.rel (%p221) target = $region36
      $region35: #{tpu_custom_call.1} parent=11 // pred_region
        _
      $region36: #{tpu_custom_call.1} parent=11 // pred_fallthru
        _
    $region12: #{tpu_custom_call.1} parent=5 // pred_fallthru
      _
    %p224 = scmp.lt.s32.totalorder %s13, 2
    // Predicated region
    $region37: #{tpu_custom_call.1} parent=5 // pred_check
      %p225 = pneg %p224
    $region38: #{tpu_custom_call.1} parent=5 // pred_check_branch
      %227 = sbr.rel (%p225) target = $region40
    $region39: #{tpu_custom_call.1} parent=5 // pred_region
      // Predicated region
      $region41: #{tpu_custom_call.1} parent=39 // pred_check
        %p228 = pneg %p33
      $region42: #{tpu_custom_call.1} parent=39 // pred_check_branch
        %230 = sbr.rel (%p228) target = $region44
      $region43: #{tpu_custom_call.1} parent=39 // pred_region
        %s231 = smul.u32 32, %s13
        %p232 = scmp.lt.s32.totalorder %s231, 63
        %s233 = scalar_select %p232, %s231, 63
        %s234 = smul.addr %s233, 8
        %s235 = scalar_lea.vmem %s0, %s234
        %s236 = smul.u32 32, %s13
      $region44: #{tpu_custom_call.1} parent=39 // pred_fallthru
        _
    $region40: #{tpu_custom_call.1} parent=5 // pred_fallthru
      _
    %p237 = scmp.le.s32.totalorder 1, %s13
    %p238 = scmp.lt.s32.totalorder %s13, 3
    %p239 = pnand %p237, %p238
    %p240 = pneg %p239
    // Predicated region
    $region45: #{tpu_custom_call.1} parent=5 // pred_check
      _
    $region46: #{tpu_custom_call.1} parent=5 // pred_check_branch
      %242 = sbr.rel (%p239) target = $region48
    $region47: #{tpu_custom_call.1} parent=5 // pred_region
      %s243 = ssub.s32 %s13, 1
      %s244 = smul.u32 32, %s18
      %p245 = scmp.lt.s32.totalorder %s244, 63
      %s246 = scalar_select %p245, %s244, 63
      %s247 = smul.addr %s246, 8
      %s248 = scalar_lea.vmem %s0, %s247
      %p249 = pneg %p39
      %p250 = pneg %p36
      %p251 = pneg %p60
      %p252 = pneg %p57
      %p253 = pneg %p81
      %p254 = pneg %p78
      %p255 = pneg %p102
      %p256 = pneg %p99
      %p257 = pneg %p123
      %p258 = pneg %p120
      %p259 = pneg %p144
      %p260 = pneg %p141
      %p261 = pneg %p165
      %p262 = pneg %p162
      %p263 = pneg %p191
      %p264 = pneg %p188
      %s265 = smul.u32 32, %s18
      %p266 = scmp.lt.s32.totalorder %s265, 63
      %s267 = scalar_select %p266, %s265, 63
      %s268 = smul.addr %s267, 8
      %s269 = scalar_lea.vmem %s7, %s268
      %s270 = smul.u32 32, %s18
      %p271 = scmp.lt.s32.totalorder %s270, 63
      %s272 = scalar_select %p271, %s270, 63
      %s273 = smul.addr %s272, 8
      %s274 = scalar_lea.vmem %s0, %s273
      %s275 = smul.u32 32, %s18
      %s276 = smul.u32 32, %s18
      %p277 = scmp.lt.s32.totalorder %s276, 63
      %s278 = scalar_select %p277, %s276, 63
      %s279 = smul.addr %s278, 8
      %s280 = scalar_lea.vmem %s7, %s279
      %s281 = smul.u32 32, %s18
      %v282 = vld [vmem:[%s274] sm:$0xff]
      %v283 = vld [vmem:[%s274 + $0x8] sm:$0xff]
      %v284 = vld [vmem:[%s274 + $0x10] sm:$0xff]
      %v285 = vld [vmem:[%s274 + $0x18] sm:$0xff]
      %v286 = vld [vmem:[%s274 + $0x20] sm:$0xff]
      %v287 = vld [vmem:[%s274 + $0x28] sm:$0xff]
      %v288 = vld [vmem:[%s274 + $0x30] sm:$0xff]
      %v289 = vld [vmem:[%s274 + $0x38] sm:$0xff]
      %v290 = vld [vmem:[%s274 + $0x40] sm:$0xff]
      %v291 = vld [vmem:[%s274 + $0x48] sm:$0xff]
      %v292 = vld [vmem:[%s274 + $0x50] sm:$0xff]
      %v293 = vld [vmem:[%s274 + $0x58] sm:$0xff]
      %v294 = vld [vmem:[%s274 + $0x60] sm:$0xff]
      %v295 = vld [vmem:[%s274 + $0x68] sm:$0xff]
      %v296 = vld [vmem:[%s274 + $0x70] sm:$0xff]
      %v297 = vld [vmem:[%s274 + $0x78] sm:$0xff]
      %v298 = vld [vmem:[%s274 + $0x80] sm:$0xff]
      %v299 = vld [vmem:[%s274 + $0x88] sm:$0xff]
      %v300 = vld [vmem:[%s274 + $0x90] sm:$0xff]
      %v301 = vld [vmem:[%s274 + $0x98] sm:$0xff]
      %v302 = vld [vmem:[%s274 + $0xa0] sm:$0xff]
      %v303 = vld [vmem:[%s274 + $0xa8] sm:$0xff]
      %v304 = vld [vmem:[%s274 + $0xb0] sm:$0xff]
      %v305 = vld [vmem:[%s274 + $0xb8] sm:$0xff]
      %v306 = vld [vmem:[%s274 + $0xc0] sm:$0xff]
      %v307 = vld [vmem:[%s274 + $0xc8] sm:$0xff]
      %v308 = vld [vmem:[%s274 + $0xd0] sm:$0xff]
      %v309 = vld [vmem:[%s274 + $0xd8] sm:$0xff]
      %v310 = vld [vmem:[%s274 + $0xe0] sm:$0xff]
      %v311 = vld [vmem:[%s274 + $0xe8] sm:$0xff]
      %v312 = vld [vmem:[%s274 + $0xf0] sm:$0xff]
      %v313 = vld [vmem:[%s274 + $0xf8] sm:$0xff]
      %v314 = vld [vmem:[%s1] sm:$0xff]
      %v315 = vld [vmem:[%s1 + $0x8] sm:$0xff]
      %v316 = vld [vmem:[%s2] sm:$0x1]
      %v318 = vlaneseq
      %v319 = vshrl.u32 %v318, 7
      %v320 = vsub.s32 0, %v319
      %v321 = vrot.slane %v316, %v320
      %vm323 = vcmask 130048
      %v325 = vsel %vm323, %v282, 0
      %v328 = vsel %vm323, %v283, 0
      %v331 = vsel %vm323, %v284, 0
      %v334 = vsel %vm323, %v285, 0
      %v337 = vsel %vm323, %v286, 0
      %v340 = vsel %vm323, %v287, 0
      %v343 = vsel %vm323, %v288, 0
      %v346 = vsel %vm323, %v289, 0
      %v349 = vsel %vm323, %v290, 0
      %v352 = vsel %vm323, %v291, 0
      %v355 = vsel %vm323, %v292, 0
      %v358 = vsel %vm323, %v293, 0
      %v361 = vsel %vm323, %v294, 0
      %v364 = vsel %vm323, %v295, 0
      %v367 = vsel %vm323, %v296, 0
      %v370 = vsel %vm323, %v297, 0
      %v373 = vsel %vm323, %v298, 0
      %v376 = vsel %vm323, %v299, 0
      %v379 = vsel %vm323, %v300, 0
      %v382 = vsel %vm323, %v301, 0
      %v385 = vsel %vm323, %v302, 0
      %v388 = vsel %vm323, %v303, 0
      %v391 = vsel %vm323, %v304, 0
      %v394 = vsel %vm323, %v305, 0
      %v397 = vsel %vm323, %v306, 0
      %v400 = vsel %vm323, %v307, 0
      %v403 = vsel %vm323, %v308, 0
      %v406 = vsel %vm323, %v309, 0
      %v409 = vsel %vm323, %v310, 0
      %v412 = vsel %vm323, %v311, 0
      %v415 = vsel %vm323, %v312, 0
      %v418 = vsel %vm323, %v313, 0
      %420 = vmatprep.subr.mxu0 0.0
      %421 = vmatpush1.msra.mxu0 %v314
      %422 = vmatprep.subr.mxu0 0.0
      %423 = vmatpush1.msra.mxu0 %v315
      %424 = vmatprep.subr.mxu0 0.0
      %425 = vmatpush1.msra.mxu0 0.0
      %426 = vmatprep.subr.mxu0 0.0
      %427 = vmatpush1.msra.mxu0 0.0
      %428 = vmatprep.subr.mxu0 0.0
      %429 = vmatpush1.msra.mxu0 0.0
      %430 = vmatprep.subr.mxu0 0.0
      %431 = vmatpush1.msra.mxu0 0.0
      %432 = vmatprep.subr.mxu0 0.0
      %433 = vmatpush1.msra.mxu0 0.0
      %434 = vmatprep.subr.mxu0 0.0
      %435 = vmatpush1.msra.mxu0 0.0
      %436 = vmatprep.subr.mxu0 0.0
      %437 = vmatpush1.msra.mxu0 0.0
      %438 = vmatprep.subr.mxu0 0.0
      %439 = vmatpush1.msra.mxu0 0.0
      %440 = vmatprep.subr.mxu0 0.0
      %441 = vmatpush1.msra.mxu0 0.0
      %442 = vmatprep.subr.mxu0 0.0
      %443 = vmatpush1.msra.mxu0 0.0
      %444 = vmatprep.subr.mxu0 0.0
      %445 = vmatpush1.msra.mxu0 0.0
      %446 = vmatprep.subr.mxu0 0.0
      %447 = vmatpush1.msra.mxu0 0.0
      %448 = vmatprep.subr.mxu0 0.0
      %449 = vmatpush1.msra.mxu0 0.0
      %450 = vmatprep.subr.mxu0 0.0
      %451 = vmatpush1.msra.mxu0 0.0
      %452 = vmatprep.subr.mxu0 0.0
      %453 = vmatpush1.msra.mxu0 0.0
      %454 = vmatprep.subr.mxu0 0.0
      %455 = vmatpush1.msra.mxu0 0.0
      %456 = vmatprep.subr.mxu0 0.0
      %457 = vmatpush1.msra.mxu0 0.0
      %458 = vmatprep.subr.mxu0 0.0
      %459 = vmatpush1.msra.mxu0 0.0
      %460 = vmatprep.subr.mxu0 0.0
      %461 = vmatpush1.msra.mxu0 0.0
      %462 = vmatprep.subr.mxu0 0.0
      %463 = vmatpush1.msra.mxu0 0.0
      %464 = vmatprep.subr.mxu0 0.0
      %465 = vmatpush1.msra.mxu0 0.0
      %466 = vmatprep.subr.mxu0 0.0
      %467 = vmatpush1.msra.mxu0 0.0
      %468 = vmatprep.subr.mxu0 0.0
      %469 = vmatpush1.msra.mxu0 0.0
      %470 = vmatprep.subr.mxu0 0.0
      %471 = vmatpush1.msra.mxu0 0.0
      %472 = vmatprep.subr.mxu0 0.0
      %473 = vmatpush1.msra.mxu0 0.0
      %474 = vmatprep.subr.mxu0 0.0
      %475 = vmatpush1.msra.mxu0 0.0
      %476 = vmatprep.subr.mxu0 0.0
      %477 = vmatpush1.msra.mxu0 0.0
      %478 = vmatprep.subr.mxu0 0.0
      %479 = vmatpush1.msra.mxu0 0.0
      %480 = vmatprep.subr.mxu0 0.0
      %481 = vmatpush1.msra.mxu0 0.0
      %482 = vmatprep.subr.mxu0 0.0
      %483 = vmatpush1.msra.mxu0 0.0
      %484 = vmatprep.mubr.f32.mxu0 0.0
      %485 = vmatmul.mubr.f32.gmra.mrb[0].mxu0 %v325
      %v486 = vpop.f32.mrb[0].mxu0
      %v487 = vadd.f32 %v321, %v486
      %v488 = vpop.f32.mrb[0].mxu0
      %489 = vmatprep.mubr.f32.mxu0 0.0
      %490 = vmatmul.mubr.f32.gmra.mrb[0].mxu0 %v328
      %v491 = vpop.f32.mrb[0].mxu0
      %v492 = vadd.f32 %v321, %v491
      %v493 = vpop.f32.mrb[0].mxu0
      %494 = vmatprep.mubr.f32.mxu0 0.0
      %495 = vmatmul.mubr.f32.gmra.mrb[0].mxu0 %v331
      %v496 = vpop.f32.mrb[0].mxu0
      %v497 = vadd.f32 %v321, %v496
      %v498 = vpop.f32.mrb[0].mxu0
      %499 = vmatprep.mubr.f32.mxu0 0.0
      %500 = vmatmul.mubr.f32.gmra.mrb[0].mxu0 %v334
      %v501 = vpop.f32.mrb[0].mxu0
      %v502 = vadd.f32 %v321, %v501
      %v503 = vpop.f32.mrb[0].mxu0
      %504 = vmatprep.mubr.f32.mxu0 0.0
      %505 = vmatmul.mubr.f32.gmra.mrb[0].mxu0 %v337
      %v506 = vpop.f32.mrb[0].mxu0
      %v507 = vadd.f32 %v321, %v506
      %v508 = vpop.f32.mrb[0].mxu0
      %509 = vmatprep.mubr.f32.mxu0 0.0
      %510 = vmatmul.mubr.f32.gmra.mrb[0].mxu0 %v340
      %v511 = vpop.f32.mrb[0].mxu0
      %v512 = vadd.f32 %v321, %v511
      %v513 = vpop.f32.mrb[0].mxu0
      %514 = vmatprep.mubr.f32.mxu0 0.0
      %515 = vmatmul.mubr.f32.gmra.mrb[0].mxu0 %v343
      %v516 = vpop.f32.mrb[0].mxu0
      %v517 = vadd.f32 %v321, %v516
      %v518 = vpop.f32.mrb[0].mxu0
      %519 = vmatprep.mubr.f32.mxu0 0.0
      %520 = vmatmul.mubr.f32.gmra.mrb[0].mxu0 %v346
      %v521 = vpop.f32.mrb[0].mxu0
      %v522 = vadd.f32 %v321, %v521
      %v523 = vpop.f32.mrb[0].mxu0
      %524 = vmatprep.mubr.f32.mxu0 0.0
      %525 = vmatmul.mubr.f32.gmra.mrb[0].mxu0 %v349
      %v526 = vpop.f32.mrb[0].mxu0
      %v527 = vadd.f32 %v321, %v526
      %v528 = vpop.f32.mrb[0].mxu0
      %529 = vmatprep.mubr.f32.mxu0 0.0
      %530 = vmatmul.mubr.f32.gmra.mrb[0].mxu0 %v352
      %v531 = vpop.f32.mrb[0].mxu0
      %v532 = vadd.f32 %v321, %v531
      %v533 = vpop.f32.mrb[0].mxu0
      %534 = vmatprep.mubr.f32.mxu0 0.0
      %535 = vmatmul.mubr.f32.gmra.mrb[0].mxu0 %v355
      %v536 = vpop.f32.mrb[0].mxu0
      %v537 = vadd.f32 %v321, %v536
      %v538 = vpop.f32.mrb[0].mxu0
      %539 = vmatprep.mubr.f32.mxu0 0.0
      %540 = vmatmul.mubr.f32.gmra.mrb[0].mxu0 %v358
      %v541 = vpop.f32.mrb[0].mxu0
      %v542 = vadd.f32 %v321, %v541
      %v543 = vpop.f32.mrb[0].mxu0
      %544 = vmatprep.mubr.f32.mxu0 0.0
      %545 = vmatmul.mubr.f32.gmra.mrb[0].mxu0 %v361
      %v546 = vpop.f32.mrb[0].mxu0
      %v547 = vadd.f32 %v321, %v546
      %v548 = vpop.f32.mrb[0].mxu0
      %549 = vmatprep.mubr.f32.mxu0 0.0
      %550 = vmatmul.mubr.f32.gmra.mrb[0].mxu0 %v364
      %v551 = vpop.f32.mrb[0].mxu0
      %v552 = vadd.f32 %v321, %v551
      %v553 = vpop.f32.mrb[0].mxu0
      %554 = vmatprep.mubr.f32.mxu0 0.0
      %555 = vmatmul.mubr.f32.gmra.mrb[0].mxu0 %v367
      %v556 = vpop.f32.mrb[0].mxu0
      %v557 = vadd.f32 %v321, %v556
      %v558 = vpop.f32.mrb[0].mxu0
      %559 = vmatprep.mubr.f32.mxu0 0.0
      %560 = vmatmul.mubr.f32.gmra.mrb[0].mxu0 %v370
      %v561 = vpop.f32.mrb[0].mxu0
      %v562 = vadd.f32 %v321, %v561
      %v563 = vpop.f32.mrb[0].mxu0
      %564 = vmatprep.mubr.f32.mxu0 0.0
      %565 = vmatmul.mubr.f32.gmra.mrb[0].mxu0 %v373
      %v566 = vpop.f32.mrb[0].mxu0
      %v567 = vadd.f32 %v321, %v566
      %v568 = vpop.f32.mrb[0].mxu0
      %569 = vmatprep.mubr.f32.mxu0 0.0
      %570 = vmatmul.mubr.f32.gmra.mrb[0].mxu0 %v376
      %v571 = vpop.f32.mrb[0].mxu0
      %v572 = vadd.f32 %v321, %v571
      %v573 = vpop.f32.mrb[0].mxu0
      %574 = vmatprep.mubr.f32.mxu0 0.0
      %575 = vmatmul.mubr.f32.gmra.mrb[0].mxu0 %v379
      %v576 = vpop.f32.mrb[0].mxu0
      %v577 = vadd.f32 %v321, %v576
      %v578 = vpop.f32.mrb[0].mxu0
      %579 = vmatprep.mubr.f32.mxu0 0.0
      %580 = vmatmul.mubr.f32.gmra.mrb[0].mxu0 %v382
      %v581 = vpop.f32.mrb[0].mxu0
      %v582 = vadd.f32 %v321, %v581
      %v583 = vpop.f32.mrb[0].mxu0
      %584 = vmatprep.mubr.f32.mxu0 0.0
      %585 = vmatmul.mubr.f32.gmra.mrb[0].mxu0 %v385
      %v586 = vpop.f32.mrb[0].mxu0
      %v587 = vadd.f32 %v321, %v586
      %v588 = vpop.f32.mrb[0].mxu0
      %589 = vmatprep.mubr.f32.mxu0 0.0
      %590 = vmatmul.mubr.f32.gmra.mrb[0].mxu0 %v388
      %v591 = vpop.f32.mrb[0].mxu0
      %v592 = vadd.f32 %v321, %v591
      %v593 = vpop.f32.mrb[0].mxu0
      %594 = vmatprep.mubr.f32.mxu0 0.0
      %595 = vmatmul.mubr.f32.gmra.mrb[0].mxu0 %v391
      %v596 = vpop.f32.mrb[0].mxu0
      %v597 = vadd.f32 %v321, %v596
      %v598 = vpop.f32.mrb[0].mxu0
      %599 = vmatprep.mubr.f32.mxu0 0.0
      %600 = vmatmul.mubr.f32.gmra.mrb[0].mxu0 %v394
      %v601 = vpop.f32.mrb[0].mxu0
      %v602 = vadd.f32 %v321, %v601
      %v603 = vpop.f32.mrb[0].mxu0
      %604 = vmatprep.mubr.f32.mxu0 0.0
      %605 = vmatmul.mubr.f32.gmra.mrb[0].mxu0 %v397
      %v606 = vpop.f32.mrb[0].mxu0
      %v607 = vadd.f32 %v321, %v606
      %v608 = vpop.f32.mrb[0].mxu0
      %609 = vmatprep.mubr.f32.mxu0 0.0
      %610 = vmatmul.mubr.f32.gmra.mrb[0].mxu0 %v400
      %v611 = vpop.f32.mrb[0].mxu0
      %v612 = vadd.f32 %v321, %v611
      %v613 = vpop.f32.mrb[0].mxu0
      %614 = vmatprep.mubr.f32.mxu0 0.0
      %615 = vmatmul.mubr.f32.gmra.mrb[0].mxu0 %v403
      %v616 = vpop.f32.mrb[0].mxu0
      %v617 = vadd.f32 %v321, %v616
      %v618 = vpop.f32.mrb[0].mxu0
      %619 = vmatprep.mubr.f32.mxu0 0.0
      %620 = vmatmul.mubr.f32.gmra.mrb[0].mxu0 %v406
      %v621 = vpop.f32.mrb[0].mxu0
      %v622 = vadd.f32 %v321, %v621
      %v623 = vpop.f32.mrb[0].mxu0
      %624 = vmatprep.mubr.f32.mxu0 0.0
      %625 = vmatmul.mubr.f32.gmra.mrb[0].mxu0 %v409
      %v626 = vpop.f32.mrb[0].mxu0
      %v627 = vadd.f32 %v321, %v626
      %v628 = vpop.f32.mrb[0].mxu0
      %629 = vmatprep.mubr.f32.mxu0 0.0
      %630 = vmatmul.mubr.f32.gmra.mrb[0].mxu0 %v412
      %v631 = vpop.f32.mrb[0].mxu0
      %v632 = vadd.f32 %v321, %v631
      %v633 = vpop.f32.mrb[0].mxu0
      %634 = vmatprep.mubr.f32.mxu0 0.0
      %635 = vmatmul.mubr.f32.gmra.mrb[0].mxu0 %v415
      %v636 = vpop.f32.mrb[0].mxu0
      %v637 = vadd.f32 %v321, %v636
      %v638 = vpop.f32.mrb[0].mxu0
      %639 = vmatprep.mubr.f32.mxu0 0.0
      %640 = vmatmul.mubr.f32.gmra.mrb[0].mxu0 %v418
      %v641 = vpop.f32.mrb[0].mxu0
      %v642 = vadd.f32 %v321, %v641
      %v643 = vpop.f32.mrb[0].mxu0
      %644 = vdwg.mxu0
      %v645 = vmax.f32 %v487, 0.0
      %v646 = vmax.f32 %v492, 0.0
      %v647 = vmax.f32 %v497, 0.0
      %v648 = vmax.f32 %v502, 0.0
      %v649 = vmax.f32 %v507, 0.0
      %v650 = vmax.f32 %v512, 0.0
      %v651 = vmax.f32 %v517, 0.0
      %v652 = vmax.f32 %v522, 0.0
      %v653 = vmax.f32 %v527, 0.0
      %v654 = vmax.f32 %v532, 0.0
      %v655 = vmax.f32 %v537, 0.0
      %v656 = vmax.f32 %v542, 0.0
      %v657 = vmax.f32 %v547, 0.0
      %v658 = vmax.f32 %v552, 0.0
      %v659 = vmax.f32 %v557, 0.0
      %v660 = vmax.f32 %v562, 0.0
      %v661 = vmax.f32 %v567, 0.0
      %v662 = vmax.f32 %v572, 0.0
      %v663 = vmax.f32 %v577, 0.0
      %v664 = vmax.f32 %v582, 0.0
      %v665 = vmax.f32 %v587, 0.0
      %v666 = vmax.f32 %v592, 0.0
      %v667 = vmax.f32 %v597, 0.0
      %v668 = vmax.f32 %v602, 0.0
      %v669 = vmax.f32 %v607, 0.0
      %v670 = vmax.f32 %v612, 0.0
      %v671 = vmax.f32 %v617, 0.0
      %v672 = vmax.f32 %v622, 0.0
      %v673 = vmax.f32 %v627, 0.0
      %v674 = vmax.f32 %v632, 0.0
      %v675 = vmax.f32 %v637, 0.0
      %v676 = vmax.f32 %v642, 0.0
      %v677 = vld [vmem:[%s3] sm:$0xff]
      %v678 = vld [vmem:[%s3 + $0x8] sm:$0xff]
      %v679 = vld [vmem:[%s3 + $0x10] sm:$0xff]
      %v680 = vld [vmem:[%s3 + $0x18] sm:$0xff]
      %v681 = vld [vmem:[%s4] sm:$0x1]
      %v683 = vlaneseq
      %v684 = vshrl.u32 %v683, 7
      %v685 = vsub.s32 0, %v684
      %v686 = vrot.slane %v681, %v685
      %vm688 = vcmask 261120
      %v690 = vsel %vm688, %v645, 0
      %v693 = vsel %vm688, %v646, 0
      %v696 = vsel %vm688, %v647, 0
      %v699 = vsel %vm688, %v648, 0
      %v702 = vsel %vm688, %v649, 0
      %v705 = vsel %vm688, %v650, 0
      %v708 = vsel %vm688, %v651, 0
      %v711 = vsel %vm688, %v652, 0
      %v714 = vsel %vm688, %v653, 0
      %v717 = vsel %vm688, %v654, 0
      %v720 = vsel %vm688, %v655, 0
      %v723 = vsel %vm688, %v656, 0
      %v726 = vsel %vm688, %v657, 0
      %v729 = vsel %vm688, %v658, 0
      %v732 = vsel %vm688, %v659, 0
      %v735 = vsel %vm688, %v660, 0
      %v738 = vsel %vm688, %v661, 0
      %v741 = vsel %vm688, %v662, 0
      %v744 = vsel %vm688, %v663, 0
      %v747 = vsel %vm688, %v664, 0
      %v750 = vsel %vm688, %v665, 0
      %v753 = vsel %vm688, %v666, 0
      %v756 = vsel %vm688, %v667, 0
      %v759 = vsel %vm688, %v668, 0
      %v762 = vsel %vm688, %v669, 0
      %v765 = vsel %vm688, %v670, 0
      %v768 = vsel %vm688, %v671, 0
      %v771 = vsel %vm688, %v672, 0
      %v774 = vsel %vm688, %v673, 0
      %v777 = vsel %vm688, %v674, 0
      %v780 = vsel %vm688, %v675, 0
      %v783 = vsel %vm688, %v676, 0
      %785 = vmatprep.subr.mxu0 0.0
      %786 = vmatpush1.msra.mxu0 %v677
      %787 = vmatprep.subr.mxu0 0.0
      %788 = vmatpush1.msra.mxu0 %v678
      %789 = vmatprep.subr.mxu0 0.0
      %790 = vmatpush1.msra.mxu0 %v679
      %791 = vmatprep.subr.mxu0 0.0
      %792 = vmatpush1.msra.mxu0 %v680
      %793 = vmatprep.subr.mxu0 0.0
      %794 = vmatpush1.msra.mxu0 0.0
      %795 = vmatprep.subr.mxu0 0.0
      %796 = vmatpush1.msra.mxu0 0.0
      %797 = vmatprep.subr.mxu0 0.0
      %798 = vmatpush1.msra.mxu0 0.0
      %799 = vmatprep.subr.mxu0 0.0
      %800 = vmatpush1.msra.mxu0 0.0
      %801 = vmatprep.subr.mxu0 0.0
      %802 = vmatpush1.msra.mxu0 0.0
      %803 = vmatprep.subr.mxu0 0.0
      %804 = vmatpush1.msra.mxu0 0.0
      %805 = vmatprep.subr.mxu0 0.0
      %806 = vmatpush1.msra.mxu0 0.0
      %807 = vmatprep.subr.mxu0 0.0
      %808 = vmatpush1.msra.mxu0 0.0
      %809 = vmatprep.subr.mxu0 0.0
      %810 = vmatpush1.msra.mxu0 0.0
      %811 = vmatprep.subr.mxu0 0.0
      %812 = vmatpush1.msra.mxu0 0.0
      %813 = vmatprep.subr.mxu0 0.0
      %814 = vmatpush1.msra.mxu0 0.0
      %815 = vmatprep.subr.mxu0 0.0
      %816 = vmatpush1.msra.mxu0 0.0
      %817 = vmatprep.subr.mxu0 0.0
      %818 = vmatpush1.msra.mxu0 0.0
      %819 = vmatprep.subr.mxu0 0.0
      %820 = vmatpush1.msra.mxu0 0.0
      %821 = vmatprep.subr.mxu0 0.0
      %822 = vmatpush1.msra.mxu0 0.0
      %823 = vmatprep.subr.mxu0 0.0
      %824 = vmatpush1.msra.mxu0 0.0
      %825 = vmatprep.subr.mxu0 0.0
      %826 = vmatpush1.msra.mxu0 0.0
      %827 = vmatprep.subr.mxu0 0.0
      %828 = vmatpush1.msra.mxu0 0.0
      %829 = vmatprep.subr.mxu0 0.0
      %830 = vmatpush1.msra.mxu0 0.0
      %831 = vmatprep.subr.mxu0 0.0
      %832 = vmatpush1.msra.mxu0 0.0
      %833 = vmatprep.subr.mxu0 0.0
      %834 = vmatpush1.msra.mxu0 0.0
      %835 = vmatprep.subr.mxu0 0.0
      %836 = vmatpush1.msra.mxu0 0.0
      %837 = vmatprep.subr.mxu0 0.0
      %838 = vmatpush1.msra.mxu0 0.0
      %839 = vmatprep.subr.mxu0 0.0
      %840 = vmatpush1.msra.mxu0 0.0
      %841 = vmatprep.subr.mxu0 0.0
      %842 = vmatpush1.msra.mxu0 0.0
      %843 = vmatprep.subr.mxu0 0.0
      %844 = vmatpush1.msra.mxu0 0.0
      %845 = vmatprep.subr.mxu0 0.0
      %846 = vmatpush1.msra.mxu0 0.0
      %847 = vmatprep.subr.mxu0 0.0
      %848 = vmatpush1.msra.mxu0 0.0
      %849 = vmatprep.mubr.f32.mxu0 0.0
      %850 = vmatmul.mubr.f32.gmra.mrb[0].mxu0 %v690
      %v851 = vpop.f32.mrb[0].mxu0
      %v852 = vadd.f32 %v686, %v851
      %v853 = vpop.f32.mrb[0].mxu0
      %854 = vmatprep.mubr.f32.mxu0 0.0
      %855 = vmatmul.mubr.f32.gmra.mrb[0].mxu0 %v693
      %v856 = vpop.f32.mrb[0].mxu0
      %v857 = vadd.f32 %v686, %v856
      %v858 = vpop.f32.mrb[0].mxu0
      %859 = vmatprep.mubr.f32.mxu0 0.0
      %860 = vmatmul.mubr.f32.gmra.mrb[0].mxu0 %v696
      %v861 = vpop.f32.mrb[0].mxu0
      %v862 = vadd.f32 %v686, %v861
      %v863 = vpop.f32.mrb[0].mxu0
      %864 = vmatprep.mubr.f32.mxu0 0.0
      %865 = vmatmul.mubr.f32.gmra.mrb[0].mxu0 %v699
      %v866 = vpop.f32.mrb[0].mxu0
      %v867 = vadd.f32 %v686, %v866
      %v868 = vpop.f32.mrb[0].mxu0
      %869 = vmatprep.mubr.f32.mxu0 0.0
      %870 = vmatmul.mubr.f32.gmra.mrb[0].mxu0 %v702
      %v871 = vpop.f32.mrb[0].mxu0
      %v872 = vadd.f32 %v686, %v871
      %v873 = vpop.f32.mrb[0].mxu0
      %874 = vmatprep.mubr.f32.mxu0 0.0
      %875 = vmatmul.mubr.f32.gmra.mrb[0].mxu0 %v705
      %v876 = vpop.f32.mrb[0].mxu0
      %v877 = vadd.f32 %v686, %v876
      %v878 = vpop.f32.mrb[0].mxu0
      %879 = vmatprep.mubr.f32.mxu0 0.0
      %880 = vmatmul.mubr.f32.gmra.mrb[0].mxu0 %v708
      %v881 = vpop.f32.mrb[0].mxu0
      %v882 = vadd.f32 %v686, %v881
      %v883 = vpop.f32.mrb[0].mxu0
      %884 = vmatprep.mubr.f32.mxu0 0.0
      %885 = vmatmul.mubr.f32.gmra.mrb[0].mxu0 %v711
      %v886 = vpop.f32.mrb[0].mxu0
      %v887 = vadd.f32 %v686, %v886
      %v888 = vpop.f32.mrb[0].mxu0
      %889 = vmatprep.mubr.f32.mxu0 0.0
      %890 = vmatmul.mubr.f32.gmra.mrb[0].mxu0 %v714
      %v891 = vpop.f32.mrb[0].mxu0
      %v892 = vadd.f32 %v686, %v891
      %v893 = vpop.f32.mrb[0].mxu0
      %894 = vmatprep.mubr.f32.mxu0 0.0
      %895 = vmatmul.mubr.f32.gmra.mrb[0].mxu0 %v717
      %v896 = vpop.f32.mrb[0].mxu0
      %v897 = vadd.f32 %v686, %v896
      %v898 = vpop.f32.mrb[0].mxu0
      %899 = vmatprep.mubr.f32.mxu0 0.0
      %900 = vmatmul.mubr.f32.gmra.mrb[0].mxu0 %v720
      %v901 = vpop.f32.mrb[0].mxu0
      %v902 = vadd.f32 %v686, %v901
      %v903 = vpop.f32.mrb[0].mxu0
      %904 = vmatprep.mubr.f32.mxu0 0.0
      %905 = vmatmul.mubr.f32.gmra.mrb[0].mxu0 %v723
      %v906 = vpop.f32.mrb[0].mxu0
      %v907 = vadd.f32 %v686, %v906
      %v908 = vpop.f32.mrb[0].mxu0
      %909 = vmatprep.mubr.f32.mxu0 0.0
      %910 = vmatmul.mubr.f32.gmra.mrb[0].mxu0 %v726
      %v911 = vpop.f32.mrb[0].mxu0
      %v912 = vadd.f32 %v686, %v911
      %v913 = vpop.f32.mrb[0].mxu0
      %914 = vmatprep.mubr.f32.mxu0 0.0
      %915 = vmatmul.mubr.f32.gmra.mrb[0].mxu0 %v729
      %v916 = vpop.f32.mrb[0].mxu0
      %v917 = vadd.f32 %v686, %v916
      %v918 = vpop.f32.mrb[0].mxu0
      %919 = vmatprep.mubr.f32.mxu0 0.0
      %920 = vmatmul.mubr.f32.gmra.mrb[0].mxu0 %v732
      %v921 = vpop.f32.mrb[0].mxu0
      %v922 = vadd.f32 %v686, %v921
      %v923 = vpop.f32.mrb[0].mxu0
      %924 = vmatprep.mubr.f32.mxu0 0.0
      %925 = vmatmul.mubr.f32.gmra.mrb[0].mxu0 %v735
      %v926 = vpop.f32.mrb[0].mxu0
      %v927 = vadd.f32 %v686, %v926
      %v928 = vpop.f32.mrb[0].mxu0
      %929 = vmatprep.mubr.f32.mxu0 0.0
      %930 = vmatmul.mubr.f32.gmra.mrb[0].mxu0 %v738
      %v931 = vpop.f32.mrb[0].mxu0
      %v932 = vadd.f32 %v686, %v931
      %v933 = vpop.f32.mrb[0].mxu0
      %934 = vmatprep.mubr.f32.mxu0 0.0
      %935 = vmatmul.mubr.f32.gmra.mrb[0].mxu0 %v741
      %v936 = vpop.f32.mrb[0].mxu0
      %v937 = vadd.f32 %v686, %v936
      %v938 = vpop.f32.mrb[0].mxu0
      %939 = vmatprep.mubr.f32.mxu0 0.0
      %940 = vmatmul.mubr.f32.gmra.mrb[0].mxu0 %v744
      %v941 = vpop.f32.mrb[0].mxu0
      %v942 = vadd.f32 %v686, %v941
      %v943 = vpop.f32.mrb[0].mxu0
      %944 = vmatprep.mubr.f32.mxu0 0.0
      %945 = vmatmul.mubr.f32.gmra.mrb[0].mxu0 %v747
      %v946 = vpop.f32.mrb[0].mxu0
      %v947 = vadd.f32 %v686, %v946
      %v948 = vpop.f32.mrb[0].mxu0
      %949 = vmatprep.mubr.f32.mxu0 0.0
      %950 = vmatmul.mubr.f32.gmra.mrb[0].mxu0 %v750
      %v951 = vpop.f32.mrb[0].mxu0
      %v952 = vadd.f32 %v686, %v951
      %v953 = vpop.f32.mrb[0].mxu0
      %954 = vmatprep.mubr.f32.mxu0 0.0
      %955 = vmatmul.mubr.f32.gmra.mrb[0].mxu0 %v753
      %v956 = vpop.f32.mrb[0].mxu0
      %v957 = vadd.f32 %v686, %v956
      %v958 = vpop.f32.mrb[0].mxu0
      %959 = vmatprep.mubr.f32.mxu0 0.0
      %960 = vmatmul.mubr.f32.gmra.mrb[0].mxu0 %v756
      %v961 = vpop.f32.mrb[0].mxu0
      %v962 = vadd.f32 %v686, %v961
      %v963 = vpop.f32.mrb[0].mxu0
      %964 = vmatprep.mubr.f32.mxu0 0.0
      %965 = vmatmul.mubr.f32.gmra.mrb[0].mxu0 %v759
      %v966 = vpop.f32.mrb[0].mxu0
      %v967 = vadd.f32 %v686, %v966
      %v968 = vpop.f32.mrb[0].mxu0
      %969 = vmatprep.mubr.f32.mxu0 0.0
      %970 = vmatmul.mubr.f32.gmra.mrb[0].mxu0 %v762
      %v971 = vpop.f32.mrb[0].mxu0
      %v972 = vadd.f32 %v686, %v971
      %v973 = vpop.f32.mrb[0].mxu0
      %974 = vmatprep.mubr.f32.mxu0 0.0
      %975 = vmatmul.mubr.f32.gmra.mrb[0].mxu0 %v765
      %v976 = vpop.f32.mrb[0].mxu0
      %v977 = vadd.f32 %v686, %v976
      %v978 = vpop.f32.mrb[0].mxu0
      %979 = vmatprep.mubr.f32.mxu0 0.0
      %980 = vmatmul.mubr.f32.gmra.mrb[0].mxu0 %v768
      %v981 = vpop.f32.mrb[0].mxu0
      %v982 = vadd.f32 %v686, %v981
      %v983 = vpop.f32.mrb[0].mxu0
      %984 = vmatprep.mubr.f32.mxu0 0.0
      %985 = vmatmul.mubr.f32.gmra.mrb[0].mxu0 %v771
      %v986 = vpop.f32.mrb[0].mxu0
      %v987 = vadd.f32 %v686, %v986
      %v988 = vpop.f32.mrb[0].mxu0
      %989 = vmatprep.mubr.f32.mxu0 0.0
      %990 = vmatmul.mubr.f32.gmra.mrb[0].mxu0 %v774
      %v991 = vpop.f32.mrb[0].mxu0
      %v992 = vadd.f32 %v686, %v991
      %v993 = vpop.f32.mrb[0].mxu0
      %994 = vmatprep.mubr.f32.mxu0 0.0
      %995 = vmatmul.mubr.f32.gmra.mrb[0].mxu0 %v777
      %v996 = vpop.f32.mrb[0].mxu0
      %v997 = vadd.f32 %v686, %v996
      %v998 = vpop.f32.mrb[0].mxu0
      %999 = vmatprep.mubr.f32.mxu0 0.0
      %1000 = vmatmul.mubr.f32.gmra.mrb[0].mxu0 %v780
      %v1001 = vpop.f32.mrb[0].mxu0
      %v1002 = vadd.f32 %v686, %v1001
      %v1003 = vpop.f32.mrb[0].mxu0
      %1004 = vmatprep.mubr.f32.mxu0 0.0
      %1005 = vmatmul.mubr.f32.gmra.mrb[0].mxu0 %v783
      %v1006 = vpop.f32.mrb[0].mxu0
      %v1007 = vadd.f32 %v686, %v1006
      %v1008 = vpop.f32.mrb[0].mxu0
      %1009 = vdwg.mxu0
      %v1010 = vmax.f32 %v852, 0.0
      %v1011 = vmax.f32 %v857, 0.0
      %v1012 = vmax.f32 %v862, 0.0
      %v1013 = vmax.f32 %v867, 0.0
      %v1014 = vmax.f32 %v872, 0.0
      %v1015 = vmax.f32 %v877, 0.0
      %v1016 = vmax.f32 %v882, 0.0
      %v1017 = vmax.f32 %v887, 0.0
      %v1018 = vmax.f32 %v892, 0.0
      %v1019 = vmax.f32 %v897, 0.0
      %v1020 = vmax.f32 %v902, 0.0
      %v1021 = vmax.f32 %v907, 0.0
      %v1022 = vmax.f32 %v912, 0.0
      %v1023 = vmax.f32 %v917, 0.0
      %v1024 = vmax.f32 %v922, 0.0
      %v1025 = vmax.f32 %v927, 0.0
      %v1026 = vmax.f32 %v932, 0.0
      %v1027 = vmax.f32 %v937, 0.0
      %v1028 = vmax.f32 %v942, 0.0
      %v1029 = vmax.f32 %v947, 0.0
      %v1030 = vmax.f32 %v952, 0.0
      %v1031 = vmax.f32 %v957, 0.0
      %v1032 = vmax.f32 %v962, 0.0
      %v1033 = vmax.f32 %v967, 0.0
      %v1034 = vmax.f32 %v972, 0.0
      %v1035 = vmax.f32 %v977, 0.0
      %v1036 = vmax.f32 %v982, 0.0
      %v1037 = vmax.f32 %v987, 0.0
      %v1038 = vmax.f32 %v992, 0.0
      %v1039 = vmax.f32 %v997, 0.0
      %v1040 = vmax.f32 %v1002, 0.0
      %v1041 = vmax.f32 %v1007, 0.0
      %v1042 = vld [vmem:[%s5] sm:$0xff]
      %v1043 = vld [vmem:[%s5 + $0x8] sm:$0xff]
      %v1044 = vld [vmem:[%s5 + $0x10] sm:$0xff]
      %v1045 = vld [vmem:[%s5 + $0x18] sm:$0xff]
      %v1046 = vld [vmem:[%s6] sm:$0x1]
      %v1048 = vlaneseq
      %v1049 = vshrl.u32 %v1048, 7
      %v1050 = vsub.s32 0, %v1049
      %v1051 = vrot.slane %v1046, %v1050
      %v1054 = vsel %vm688, %v1010, 0
      %v1057 = vsel %vm688, %v1011, 0
      %v1060 = vsel %vm688, %v1012, 0
      %v1063 = vsel %vm688, %v1013, 0
      %v1066 = vsel %vm688, %v1014, 0
      %v1069 = vsel %vm688, %v1015, 0
      %v1072 = vsel %vm688, %v1016, 0
      %v1075 = vsel %vm688, %v1017, 0
      %v1078 = vsel %vm688, %v1018, 0
      %v1081 = vsel %vm688, %v1019, 0
      %v1084 = vsel %vm688, %v1020, 0
      %v1087 = vsel %vm688, %v1021, 0
      %v1090 = vsel %vm688, %v1022, 0
      %v1093 = vsel %vm688, %v1023, 0
      %v1096 = vsel %vm688, %v1024, 0
      %v1099 = vsel %vm688, %v1025, 0
      %v1102 = vsel %vm688, %v1026, 0
      %v1105 = vsel %vm688, %v1027, 0
      %v1108 = vsel %vm688, %v1028, 0
      %v1111 = vsel %vm688, %v1029, 0
      %v1114 = vsel %vm688, %v1030, 0
      %v1117 = vsel %vm688, %v1031, 0
      %v1120 = vsel %vm688, %v1032, 0
      %v1123 = vsel %vm688, %v1033, 0
      %v1126 = vsel %vm688, %v1034, 0
      %v1129 = vsel %vm688, %v1035, 0
      %v1132 = vsel %vm688, %v1036, 0
      %v1135 = vsel %vm688, %v1037, 0
      %v1138 = vsel %vm688, %v1038, 0
      %v1141 = vsel %vm688, %v1039, 0
      %v1144 = vsel %vm688, %v1040, 0
      %v1147 = vsel %vm688, %v1041, 0
      %1149 = vmatprep.subr.mxu0 0.0
      %1150 = vmatpush1.msra.mxu0 %v1042
      %1151 = vmatprep.subr.mxu0 0.0
      %1152 = vmatpush1.msra.mxu0 %v1043
      %1153 = vmatprep.subr.mxu0 0.0
      %1154 = vmatpush1.msra.mxu0 %v1044
      %1155 = vmatprep.subr.mxu0 0.0
      %1156 = vmatpush1.msra.mxu0 %v1045
      %1157 = vmatprep.subr.mxu0 0.0
      %1158 = vmatpush1.msra.mxu0 0.0
      %1159 = vmatprep.subr.mxu0 0.0
      %1160 = vmatpush1.msra.mxu0 0.0
      %1161 = vmatprep.subr.mxu0 0.0
      %1162 = vmatpush1.msra.mxu0 0.0
      %1163 = vmatprep.subr.mxu0 0.0
      %1164 = vmatpush1.msra.mxu0 0.0
      %1165 = vmatprep.subr.mxu0 0.0
      %1166 = vmatpush1.msra.mxu0 0.0
      %1167 = vmatprep.subr.mxu0 0.0
      %1168 = vmatpush1.msra.mxu0 0.0
      %1169 = vmatprep.subr.mxu0 0.0
      %1170 = vmatpush1.msra.mxu0 0.0
      %1171 = vmatprep.subr.mxu0 0.0
      %1172 = vmatpush1.msra.mxu0 0.0
      %1173 = vmatprep.subr.mxu0 0.0
      %1174 = vmatpush1.msra.mxu0 0.0
      %1175 = vmatprep.subr.mxu0 0.0
      %1176 = vmatpush1.msra.mxu0 0.0
      %1177 = vmatprep.subr.mxu0 0.0
      %1178 = vmatpush1.msra.mxu0 0.0
      %1179 = vmatprep.subr.mxu0 0.0
      %1180 = vmatpush1.msra.mxu0 0.0
      %1181 = vmatprep.subr.mxu0 0.0
      %1182 = vmatpush1.msra.mxu0 0.0
      %1183 = vmatprep.subr.mxu0 0.0
      %1184 = vmatpush1.msra.mxu0 0.0
      %1185 = vmatprep.subr.mxu0 0.0
      %1186 = vmatpush1.msra.mxu0 0.0
      %1187 = vmatprep.subr.mxu0 0.0
      %1188 = vmatpush1.msra.mxu0 0.0
      %1189 = vmatprep.subr.mxu0 0.0
      %1190 = vmatpush1.msra.mxu0 0.0
      %1191 = vmatprep.subr.mxu0 0.0
      %1192 = vmatpush1.msra.mxu0 0.0
      %1193 = vmatprep.subr.mxu0 0.0
      %1194 = vmatpush1.msra.mxu0 0.0
      %1195 = vmatprep.subr.mxu0 0.0
      %1196 = vmatpush1.msra.mxu0 0.0
      %1197 = vmatprep.subr.mxu0 0.0
      %1198 = vmatpush1.msra.mxu0 0.0
      %1199 = vmatprep.subr.mxu0 0.0
      %1200 = vmatpush1.msra.mxu0 0.0
      %1201 = vmatprep.subr.mxu0 0.0
      %1202 = vmatpush1.msra.mxu0 0.0
      %1203 = vmatprep.subr.mxu0 0.0
      %1204 = vmatpush1.msra.mxu0 0.0
      %1205 = vmatprep.subr.mxu0 0.0
      %1206 = vmatpush1.msra.mxu0 0.0
      %1207 = vmatprep.subr.mxu0 0.0
      %1208 = vmatpush1.msra.mxu0 0.0
      %1209 = vmatprep.subr.mxu0 0.0
      %1210 = vmatpush1.msra.mxu0 0.0
      %1211 = vmatprep.subr.mxu0 0.0
      %1212 = vmatpush1.msra.mxu0 0.0
      %1213 = vmatprep.mubr.f32.mxu0 0.0
      %1214 = vmatmul.mubr.f32.gmra.mrb[0].mxu0 %v1054
      %v1215 = vpop.f32.mrb[0].mxu0
      %v1216 = vadd.f32 %v1051, %v1215
      %v1217 = vpop.f32.mrb[0].mxu0
      %1218 = vmatprep.mubr.f32.mxu0 0.0
      %1219 = vmatmul.mubr.f32.gmra.mrb[0].mxu0 %v1057
      %v1220 = vpop.f32.mrb[0].mxu0
      %v1221 = vadd.f32 %v1051, %v1220
      %v1222 = vpop.f32.mrb[0].mxu0
      %1223 = vmatprep.mubr.f32.mxu0 0.0
      %1224 = vmatmul.mubr.f32.gmra.mrb[0].mxu0 %v1060
      %v1225 = vpop.f32.mrb[0].mxu0
      %v1226 = vadd.f32 %v1051, %v1225
      %v1227 = vpop.f32.mrb[0].mxu0
      %1228 = vmatprep.mubr.f32.mxu0 0.0
      %1229 = vmatmul.mubr.f32.gmra.mrb[0].mxu0 %v1063
      %v1230 = vpop.f32.mrb[0].mxu0
      %v1231 = vadd.f32 %v1051, %v1230
      %v1232 = vpop.f32.mrb[0].mxu0
      %1233 = vmatprep.mubr.f32.mxu0 0.0
      %1234 = vmatmul.mubr.f32.gmra.mrb[0].mxu0 %v1066
      %v1235 = vpop.f32.mrb[0].mxu0
      %v1236 = vadd.f32 %v1051, %v1235
      %v1237 = vpop.f32.mrb[0].mxu0
      %1238 = vmatprep.mubr.f32.mxu0 0.0
      %1239 = vmatmul.mubr.f32.gmra.mrb[0].mxu0 %v1069
      %v1240 = vpop.f32.mrb[0].mxu0
      %v1241 = vadd.f32 %v1051, %v1240
      %v1242 = vpop.f32.mrb[0].mxu0
      %1243 = vmatprep.mubr.f32.mxu0 0.0
      %1244 = vmatmul.mubr.f32.gmra.mrb[0].mxu0 %v1072
      %v1245 = vpop.f32.mrb[0].mxu0
      %v1246 = vadd.f32 %v1051, %v1245
      %v1247 = vpop.f32.mrb[0].mxu0
      %1248 = vmatprep.mubr.f32.mxu0 0.0
      %1249 = vmatmul.mubr.f32.gmra.mrb[0].mxu0 %v1075
      %v1250 = vpop.f32.mrb[0].mxu0
      %v1251 = vadd.f32 %v1051, %v1250
      %v1252 = vpop.f32.mrb[0].mxu0
      %1253 = vmatprep.mubr.f32.mxu0 0.0
      %1254 = vmatmul.mubr.f32.gmra.mrb[0].mxu0 %v1078
      %v1255 = vpop.f32.mrb[0].mxu0
      %v1256 = vadd.f32 %v1051, %v1255
      %v1257 = vpop.f32.mrb[0].mxu0
      %1258 = vmatprep.mubr.f32.mxu0 0.0
      %1259 = vmatmul.mubr.f32.gmra.mrb[0].mxu0 %v1081
      %v1260 = vpop.f32.mrb[0].mxu0
      %v1261 = vadd.f32 %v1051, %v1260
      %v1262 = vpop.f32.mrb[0].mxu0
      %1263 = vmatprep.mubr.f32.mxu0 0.0
      %1264 = vmatmul.mubr.f32.gmra.mrb[0].mxu0 %v1084
      %v1265 = vpop.f32.mrb[0].mxu0
      %v1266 = vadd.f32 %v1051, %v1265
      %v1267 = vpop.f32.mrb[0].mxu0
      %1268 = vmatprep.mubr.f32.mxu0 0.0
      %1269 = vmatmul.mubr.f32.gmra.mrb[0].mxu0 %v1087
      %v1270 = vpop.f32.mrb[0].mxu0
      %v1271 = vadd.f32 %v1051, %v1270
      %v1272 = vpop.f32.mrb[0].mxu0
      %1273 = vmatprep.mubr.f32.mxu0 0.0
      %1274 = vmatmul.mubr.f32.gmra.mrb[0].mxu0 %v1090
      %v1275 = vpop.f32.mrb[0].mxu0
      %v1276 = vadd.f32 %v1051, %v1275
      %v1277 = vpop.f32.mrb[0].mxu0
      %1278 = vmatprep.mubr.f32.mxu0 0.0
      %1279 = vmatmul.mubr.f32.gmra.mrb[0].mxu0 %v1093
      %v1280 = vpop.f32.mrb[0].mxu0
      %v1281 = vadd.f32 %v1051, %v1280
      %v1282 = vpop.f32.mrb[0].mxu0
      %1283 = vmatprep.mubr.f32.mxu0 0.0
      %1284 = vmatmul.mubr.f32.gmra.mrb[0].mxu0 %v1096
      %v1285 = vpop.f32.mrb[0].mxu0
      %v1286 = vadd.f32 %v1051, %v1285
      %v1287 = vpop.f32.mrb[0].mxu0
      %1288 = vmatprep.mubr.f32.mxu0 0.0
      %1289 = vmatmul.mubr.f32.gmra.mrb[0].mxu0 %v1099
      %v1290 = vpop.f32.mrb[0].mxu0
      %v1291 = vadd.f32 %v1051, %v1290
      %v1292 = vpop.f32.mrb[0].mxu0
      %1293 = vmatprep.mubr.f32.mxu0 0.0
      %1294 = vmatmul.mubr.f32.gmra.mrb[0].mxu0 %v1102
      %v1295 = vpop.f32.mrb[0].mxu0
      %v1296 = vadd.f32 %v1051, %v1295
      %v1297 = vpop.f32.mrb[0].mxu0
      %1298 = vmatprep.mubr.f32.mxu0 0.0
      %1299 = vmatmul.mubr.f32.gmra.mrb[0].mxu0 %v1105
      %v1300 = vpop.f32.mrb[0].mxu0
      %v1301 = vadd.f32 %v1051, %v1300
      %v1302 = vpop.f32.mrb[0].mxu0
      %1303 = vmatprep.mubr.f32.mxu0 0.0
      %1304 = vmatmul.mubr.f32.gmra.mrb[0].mxu0 %v1108
      %v1305 = vpop.f32.mrb[0].mxu0
      %v1306 = vadd.f32 %v1051, %v1305
      %v1307 = vpop.f32.mrb[0].mxu0
      %1308 = vmatprep.mubr.f32.mxu0 0.0
      %1309 = vmatmul.mubr.f32.gmra.mrb[0].mxu0 %v1111
      %v1310 = vpop.f32.mrb[0].mxu0
      %v1311 = vadd.f32 %v1051, %v1310
      %v1312 = vpop.f32.mrb[0].mxu0
      %1313 = vmatprep.mubr.f32.mxu0 0.0
      %1314 = vmatmul.mubr.f32.gmra.mrb[0].mxu0 %v1114
      %v1315 = vpop.f32.mrb[0].mxu0
      %v1316 = vadd.f32 %v1051, %v1315
      %v1317 = vpop.f32.mrb[0].mxu0
      %1318 = vmatprep.mubr.f32.mxu0 0.0
      %1319 = vmatmul.mubr.f32.gmra.mrb[0].mxu0 %v1117
      %v1320 = vpop.f32.mrb[0].mxu0
      %v1321 = vadd.f32 %v1051, %v1320
      %v1322 = vpop.f32.mrb[0].mxu0
      %1323 = vmatprep.mubr.f32.mxu0 0.0
      %1324 = vmatmul.mubr.f32.gmra.mrb[0].mxu0 %v1120
      %v1325 = vpop.f32.mrb[0].mxu0
      %v1326 = vadd.f32 %v1051, %v1325
      %v1327 = vpop.f32.mrb[0].mxu0
      %1328 = vmatprep.mubr.f32.mxu0 0.0
      %1329 = vmatmul.mubr.f32.gmra.mrb[0].mxu0 %v1123
      %v1330 = vpop.f32.mrb[0].mxu0
      %v1331 = vadd.f32 %v1051, %v1330
      %v1332 = vpop.f32.mrb[0].mxu0
      %1333 = vmatprep.mubr.f32.mxu0 0.0
      %1334 = vmatmul.mubr.f32.gmra.mrb[0].mxu0 %v1126
      %v1335 = vpop.f32.mrb[0].mxu0
      %v1336 = vadd.f32 %v1051, %v1335
      %v1337 = vpop.f32.mrb[0].mxu0
      %1338 = vmatprep.mubr.f32.mxu0 0.0
      %1339 = vmatmul.mubr.f32.gmra.mrb[0].mxu0 %v1129
      %v1340 = vpop.f32.mrb[0].mxu0
      %v1341 = vadd.f32 %v1051, %v1340
      %v1342 = vpop.f32.mrb[0].mxu0
      %1343 = vmatprep.mubr.f32.mxu0 0.0
      %1344 = vmatmul.mubr.f32.gmra.mrb[0].mxu0 %v1132
      %v1345 = vpop.f32.mrb[0].mxu0
      %v1346 = vadd.f32 %v1051, %v1345
      %v1347 = vpop.f32.mrb[0].mxu0
      %1348 = vmatprep.mubr.f32.mxu0 0.0
      %1349 = vmatmul.mubr.f32.gmra.mrb[0].mxu0 %v1135
      %v1350 = vpop.f32.mrb[0].mxu0
      %v1351 = vadd.f32 %v1051, %v1350
      %v1352 = vpop.f32.mrb[0].mxu0
      %1353 = vmatprep.mubr.f32.mxu0 0.0
      %1354 = vmatmul.mubr.f32.gmra.mrb[0].mxu0 %v1138
      %v1355 = vpop.f32.mrb[0].mxu0
      %v1356 = vadd.f32 %v1051, %v1355
      %v1357 = vpop.f32.mrb[0].mxu0
      %1358 = vmatprep.mubr.f32.mxu0 0.0
      %1359 = vmatmul.mubr.f32.gmra.mrb[0].mxu0 %v1141
      %v1360 = vpop.f32.mrb[0].mxu0
      %v1361 = vadd.f32 %v1051, %v1360
      %v1362 = vpop.f32.mrb[0].mxu0
      %1363 = vmatprep.mubr.f32.mxu0 0.0
      %1364 = vmatmul.mubr.f32.gmra.mrb[0].mxu0 %v1144
      %v1365 = vpop.f32.mrb[0].mxu0
      %v1366 = vadd.f32 %v1051, %v1365
      %v1367 = vpop.f32.mrb[0].mxu0
      %1368 = vmatprep.mubr.f32.mxu0 0.0
      %1369 = vmatmul.mubr.f32.gmra.mrb[0].mxu0 %v1147
      %v1370 = vpop.f32.mrb[0].mxu0
      %v1371 = vadd.f32 %v1051, %v1370
      %v1372 = vpop.f32.mrb[0].mxu0
      %1373 = vdwg.mxu0
      %vm1374 = vcmask 64512
      %1375 = vst.msk [vmem:[%s280] sm:$0xff] %vm1374, %v1216
      %1376 = vst.msk [vmem:[%s280 + $0x8] sm:$0xff] %vm1374, %v1221
      %1377 = vst.msk [vmem:[%s280 + $0x10] sm:$0xff] %vm1374, %v1226
      %1378 = vst.msk [vmem:[%s280 + $0x18] sm:$0xff] %vm1374, %v1231
      %1379 = vst.msk [vmem:[%s280 + $0x20] sm:$0xff] %vm1374, %v1236
      %1380 = vst.msk [vmem:[%s280 + $0x28] sm:$0xff] %vm1374, %v1241
      %1381 = vst.msk [vmem:[%s280 + $0x30] sm:$0xff] %vm1374, %v1246
      %1382 = vst.msk [vmem:[%s280 + $0x38] sm:$0xff] %vm1374, %v1251
      %1383 = vst.msk [vmem:[%s280 + $0x40] sm:$0xff] %vm1374, %v1256
      %1384 = vst.msk [vmem:[%s280 + $0x48] sm:$0xff] %vm1374, %v1261
      %1385 = vst.msk [vmem:[%s280 + $0x50] sm:$0xff] %vm1374, %v1266
      %1386 = vst.msk [vmem:[%s280 + $0x58] sm:$0xff] %vm1374, %v1271
      %1387 = vst.msk [vmem:[%s280 + $0x60] sm:$0xff] %vm1374, %v1276
      %1388 = vst.msk [vmem:[%s280 + $0x68] sm:$0xff] %vm1374, %v1281
      %1389 = vst.msk [vmem:[%s280 + $0x70] sm:$0xff] %vm1374, %v1286
      %1390 = vst.msk [vmem:[%s280 + $0x78] sm:$0xff] %vm1374, %v1291
      %1391 = vst.msk [vmem:[%s280 + $0x80] sm:$0xff] %vm1374, %v1296
      %1392 = vst.msk [vmem:[%s280 + $0x88] sm:$0xff] %vm1374, %v1301
      %1393 = vst.msk [vmem:[%s280 + $0x90] sm:$0xff] %vm1374, %v1306
      %1394 = vst.msk [vmem:[%s280 + $0x98] sm:$0xff] %vm1374, %v1311
      %1395 = vst.msk [vmem:[%s280 + $0xa0] sm:$0xff] %vm1374, %v1316
      %1396 = vst.msk [vmem:[%s280 + $0xa8] sm:$0xff] %vm1374, %v1321
      %1397 = vst.msk [vmem:[%s280 + $0xb0] sm:$0xff] %vm1374, %v1326
      %1398 = vst.msk [vmem:[%s280 + $0xb8] sm:$0xff] %vm1374, %v1331
      %1399 = vst.msk [vmem:[%s280 + $0xc0] sm:$0xff] %vm1374, %v1336
      %1400 = vst.msk [vmem:[%s280 + $0xc8] sm:$0xff] %vm1374, %v1341
      %1401 = vst.msk [vmem:[%s280 + $0xd0] sm:$0xff] %vm1374, %v1346
      %1402 = vst.msk [vmem:[%s280 + $0xd8] sm:$0xff] %vm1374, %v1351
      %1403 = vst.msk [vmem:[%s280 + $0xe0] sm:$0xff] %vm1374, %v1356
      %1404 = vst.msk [vmem:[%s280 + $0xe8] sm:$0xff] %vm1374, %v1361
      %1405 = vst.msk [vmem:[%s280 + $0xf0] sm:$0xff] %vm1374, %v1366
      %1406 = vst.msk [vmem:[%s280 + $0xf8] sm:$0xff] %vm1374, %v1371
      %s1407 = smul.u32 32, %s18
      %p1408 = scmp.lt.s32.totalorder %s1407, 63
      %s1409 = scalar_select %p1408, %s1407, 63
      %s1410 = smul.addr %s1409, 8
      %s1411 = scalar_lea.vmem %s7, %s1410
      // Predicated region
      $region49: #{tpu_custom_call.1} parent=47 // pred_check
        %p1412 = pneg %p188
      $region50: #{tpu_custom_call.1} parent=47 // pred_check_branch
        %1414 = sbr.rel (%p1412) target = $region52
      $region51: #{tpu_custom_call.1} parent=47 // pred_region
        %s1415 = smul.u32 32, %s18
      $region52: #{tpu_custom_call.1} parent=47 // pred_fallthru
        _
    $region48: #{tpu_custom_call.1} parent=5 // pred_fallthru
      _
    %p1416 = scmp.le.s32.totalorder 2, %s13
    // Predicated region
    $region53: #{tpu_custom_call.1} parent=5 // pred_check
      %p1417 = pneg %p1416
    $region54: #{tpu_custom_call.1} parent=5 // pred_check_branch
      %1419 = sbr.rel (%p1417) target = $region56
    $region55: #{tpu_custom_call.1} parent=5 // pred_region
      %s1420 = ssub.s32 %s13, 2
      // Predicated region
      $region57: #{tpu_custom_call.1} parent=55 // pred_check
        %p1421 = pneg %p194
      $region58: #{tpu_custom_call.1} parent=55 // pred_check_branch
        %1423 = sbr.rel (%p1421) target = $region60
      $region59: #{tpu_custom_call.1} parent=55 // pred_region
        %s1424 = smul.u32 32, %s19
        %p1425 = scmp.lt.s32.totalorder %s1424, 63
        %s1426 = scalar_select %p1425, %s1424, 63
        %s1427 = smul.addr %s1426, 8
        %s1428 = scalar_lea.vmem %s7, %s1427
      $region60: #{tpu_custom_call.1} parent=55 // pred_fallthru
        _
    $region56: #{tpu_custom_call.1} parent=5 // pred_fallthru
      _
  $region6: #{tpu_custom_call.1} parent=0 // loop_footer
    %s17 = sadd.s32 1, %s13
  $region7: #{tpu_custom_call.1} parent=0 // loop_footer_branch
    %12 = sbr.rel target = $region3
  $region8: #{tpu_custom_call.1} parent=0 // loop_exit
    _

</llo_original>
